<compile_context>
chip_gen: v6e
topology: v6e:2x2x1
jax: 0.10.0
libtpu: 0.0.40
codegen_flags: <defaults>
</compile_context>

<pallas_src>
import functools

import jax
import jax.numpy as jnp
from jax.experimental import pallas as pl
from jax.experimental.pallas import tpu as pltpu

# Layer sizes of the linear_relu_stack (in_features, out_features).
LAYER_DIMS = [(18, 36), (36, 36), (36, 54), (54, 54), (54, 36), (36, 18), (18, 5)]
NUM_LAYERS = len(LAYER_DIMS)
PAD = 128          # lane-dense padded feature width (covers max dim 54)
IN_FEATURES = 18
OUT_FEATURES = 5
MAX_TB = 4096      # batch-tile cap (bf16 activations): ~1 MiB per x/out buffer,
                   # ~5 MiB total with double-buffering + resident weights.


def _round_up(x, m):
    return ((x + m - 1) // m) * m


def _choose_tile_b(batch):
    """Batch tile: multiple of 8 sublanes, >=2 grid steps when it matters."""
    if batch <= 64:
        # Too small to split; one tiny tile.
        return _round_up(max(batch, 8), 8)
    # Guarantee at least 2 grid steps so v7x's 2 TensorCores can both be used
    # via dimension_semantics=("parallel",); cap tile size for VMEM.
    return min(MAX_TB, _round_up(pl.cdiv(batch, 2), 8))


def mlp_kernel(x_ref, w_ref, b_ref, o_ref):
    """One batch tile of the whole 7-layer MLP.

    x_ref : (TB, 128)      bf16 zero-padded activations
    w_ref : (7, 128, 128)  bf16 zero-padded weights (resident across steps)
    b_ref : (7, 1, 128)    f32  zero-padded biases  (resident across steps)
    o_ref : (TB, 128)      bf16 zero-padded output block (logits in cols 0..4)
    """
    h = x_ref[...]                                     # bf16 on entry
    for layer in range(NUM_LAYERS):                    # unrolled: 7 (TB,128)@(128,128)
        # bf16 MXU operands, f32 accumulation.
        acc = jnp.dot(h.astype(jnp.bfloat16), w_ref[layer],
                      preferred_element_type=jnp.float32)
        acc = acc + b_ref[layer]                       # f32 bias add (VPU-native on v5e too)
        if layer < NUM_LAYERS - 1:
            acc = jnp.maximum(acc, 0.0)                # f32 ReLU on hidden layers only
        h = acc
    o_ref[...] = h.astype(o_ref.dtype)                 # bf16 lane-dense writeback


def init_params(key):
    """Deterministic parameter init (PyTorch-Linear-style uniform bounds).

    Returns a flat list [w1, b1, ..., w7, b7] with w: (in, out), b: (1, out),
    i.e. y = x @ W + b matches PyTorch's y = x @ W.T + b.
    """
    params = []
    for (fan_in, fan_out) in LAYER_DIMS:
        key, kw, kb = jax.random.split(key, 3)
        bound = 1.0 / jnp.sqrt(jnp.float32(fan_in))
        w = jax.random.uniform(kw, (fan_in, fan_out), jnp.float32, -bound, bound)
        b = jax.random.uniform(kb, (1, fan_out), jnp.float32, -bound, bound)
        params.append(w)
        params.append(b)
    return params


def pack_params(params):
    """Zero-pad and stack per-layer params into lane-dense packed tensors.

    Weights -> (7,128,128) bfloat16 (MXU operand dtype).
    Biases  -> (7,1,128)   float32  (f32 elementwise path).
    """
    w_packed = jnp.zeros((NUM_LAYERS, PAD, PAD), jnp.float32)
    b_packed = jnp.zeros((NUM_LAYERS, 1, PAD), jnp.float32)
    for i, (fan_in, fan_out) in enumerate(LAYER_DIMS):
        w = params[2 * i]
        b = params[2 * i + 1]
        w_packed = w_packed.at[i, :fan_in, :fan_out].set(w)
        b_packed = b_packed.at[i, 0, :fan_out].set(b[0])
    return w_packed.astype(jnp.bfloat16), b_packed


@functools.partial(jax.jit, static_argnames=("tile_b",))
def neural_network_classification(x, w_packed, b_packed, *, tile_b=None):
    """nn.Flatten() + linear_relu_stack forward, Pallas-accelerated."""
    batch = x.shape[0]
    x_flat = x.reshape(batch, -1)
    assert x_flat.shape[1] == IN_FEATURES, (
        f"expected {IN_FEATURES} features after flatten, got {x_flat.shape[1]}")

    if tile_b is None:
        tile_b = _choose_tile_b(batch)
    b_pad = _round_up(batch, tile_b)

    # Lane-dense, tile-aligned, bf16 padded input. Zero lanes are numerically
    # transparent through matmul + bias + ReLU. allow_input_fusion below lets
    # XLA fuse this pad/cast into the pallas_call input DMA.
    x_pad = jnp.pad(x_flat.astype(jnp.bfloat16),
                    ((0, b_pad - batch), (0, PAD - IN_FEATURES)))

    grid = (b_pad // tile_b,)

    # Padded FLOPs / bytes the kernel actually executes (per review).
    flops = 2 * b_pad * NUM_LAYERS * PAD * PAD
    bytes_accessed = (
        b_pad * PAD * 2 * 2                  # bf16 x in + bf16 out
        + NUM_LAYERS * PAD * PAD * 2         # bf16 packed weights
        + NUM_LAYERS * PAD * 4               # f32 packed biases
    )

    out_pad = pl.pallas_call(
        mlp_kernel,
        out_shape=jax.ShapeDtypeStruct((b_pad, PAD), jnp.bfloat16),
        grid=grid,
        in_specs=[
            pl.BlockSpec((tile_b, PAD), lambda i: (i, 0)),               # x: tiled over batch
            pl.BlockSpec((NUM_LAYERS, PAD, PAD), lambda i: (0, 0, 0)),   # weights: resident
            pl.BlockSpec((NUM_LAYERS, 1, PAD), lambda i: (0, 0, 0)),     # biases: resident
        ],
        out_specs=pl.BlockSpec((tile_b, PAD), lambda i: (i, 0)),
        compiler_params=pltpu.CompilerParams(
            dimension_semantics=("parallel",),       # megacore sharding on v7x
            allow_input_fusion=[True, False, False],  # fuse wrapper pad/cast into x DMA
        ),
        cost_estimate=pl.CostEstimate(
            flops=flops, transcendentals=0, bytes_accessed=bytes_accessed),
    )(x_pad, w_packed, b_packed)

    # Lane-dense bf16 kernel output -> real f32 logits.
    return out_pad[:batch, :OUT_FEATURES].astype(jnp.float32)


def reference_forward_f32(x, params):
    """Pure-JAX f32 reference (PyTorch semantics) for sanity checking."""
    h = x.reshape(x.shape[0], -1).astype(jnp.float32)
    n_layers = len(params) // 2
    for i in range(n_layers):
        w, b = params[2 * i], params[2 * i + 1]
        h = h @ w + b
        if i < n_layers - 1:
            h = jnp.maximum(h, 0.0)
    return h


def reference_forward_bf16(x, params):
    """Reference that mirrors the kernel arithmetic (bf16 dot operands, f32 accum)."""
    h = x.reshape(x.shape[0], -1).astype(jnp.float32)
    n_layers = len(params) // 2
    for i in range(n_layers):
        w, b = params[2 * i], params[2 * i + 1]
        h = jnp.dot(h.astype(jnp.bfloat16), w.astype(jnp.bfloat16),
                    preferred_element_type=jnp.float32) + b
        if i < n_layers - 1:
            h = jnp.maximum(h, 0.0)
    return h


if __name__ == "__main__":
    key = jax.random.PRNGKey(0)
    key_x, key_p = jax.random.split(key)

    # Small input consistent with the module: flatten(x) must yield 18 features.
    # layout: (B, C, L) = (2, 3, 6) -> flatten -> (2, 18)
    x = jax.random.normal(key_x, (2, 3, 6), dtype=jnp.float32)
    params = init_params(key_p)
    w_packed, b_packed = pack_params(params)

    out = neural_network_classification(x, w_packed, b_packed)
    out = jax.block_until_ready(out)
    assert out.shape == (2, 5), out.shape
    # Tight check vs a reference using the same bf16-operand / f32-accum math.
    assert jnp.allclose(out, reference_forward_bf16(x, params),
                        atol=2e-2, rtol=2e-2), "mismatch vs bf16 reference"
    # Loose sanity check vs the exact f32 PyTorch-semantics reference.
    assert jnp.allclose(out, reference_forward_f32(x, params),
                        atol=1e-1, rtol=1e-1), "mismatch vs f32 reference"

    # Larger, non-tile-aligned batch: exercises the >=2-step ("parallel") grid path.
    x_big = jax.random.normal(key_x, (300, 3, 6), dtype=jnp.float32)
    out_big = jax.block_until_ready(
        neural_network_classification(x_big, w_packed, b_packed))
    assert out_big.shape == (300, 5), out_big.shape
    assert jnp.allclose(out_big, reference_forward_bf16(x_big, params),
                        atol=2e-2, rtol=2e-2), "mismatch (big batch, bf16 ref)"
    assert jnp.allclose(out_big, reference_forward_f32(x_big, params),
                        atol=1e-1, rtol=1e-1), "mismatch (big batch, f32 ref)"

    print("KERNEL_OK")
</pallas_src>

<mosaic_0001>
module attributes {stable_mosaic.version = 11 : i64} {
  func.func @mlp_kernel(%arg0: i32, %arg1: memref<8x128xbf16, #tpu.memory_space<vmem>>, %arg2: memref<7x128x128xbf16, #tpu.memory_space<vmem>>, %arg3: memref<7x1x128xf32, #tpu.memory_space<vmem>>, %arg4: memref<8x128xbf16, #tpu.memory_space<vmem>>) attributes {dimension_semantics = [#tpu.dimension_semantics<parallel>], iteration_bounds = array<i64: 1>, scalar_prefetch = 0 : i64, scratch_operands = 0 : i64, tpu.core_type = #tpu.core_type<tc>, window_params = [{transform_indices = @transform_0, window_bounds = array<i64: 8, 128>}, {pipeline_mode = #tpu.pipeline_mode<synchronous>, transform_indices = @transform_1, window_bounds = array<i64: 7, 128, 128>}, {pipeline_mode = #tpu.pipeline_mode<synchronous>, transform_indices = @transform_2, window_bounds = array<i64: 7, 1, 128>}, {transform_indices = @transform_3, window_bounds = array<i64: 8, 128>}]} {
    %c0 = arith.constant 0 : index
    %c0_0 = arith.constant 0 : index
    %0 = vector.load %arg1[%c0, %c0_0] : memref<8x128xbf16, #tpu.memory_space<vmem>>, vector<8x128xbf16>
    %c0_1 = arith.constant 0 : index
    %c0_2 = arith.constant 0 : index
    %c0_3 = arith.constant 0 : index
    %1 = vector.load %arg2[%c0_1, %c0_2, %c0_3] : memref<7x128x128xbf16, #tpu.memory_space<vmem>>, vector<1x128x128xbf16>
    %2 = vector.shape_cast %1 : vector<1x128x128xbf16> to vector<128x128xbf16>
    %cst = arith.constant dense<0.000000e+00> : vector<8x128xf32>
    %3 = tpu.matmul %0, %2, %cst {dimension_numbers = #tpu.dot_dimension_numbers<[1], [0], [0], [1], [0, 0, 1, 1], [], []>} : vector<8x128xbf16>, vector<128x128xbf16>, vector<8x128xf32> -> vector<8x128xf32>
    %c0_4 = arith.constant 0 : index
    %c0_5 = arith.constant 0 : index
    %c0_6 = arith.constant 0 : index
    %4 = vector.load %arg3[%c0_4, %c0_5, %c0_6] : memref<7x1x128xf32, #tpu.memory_space<vmem>>, vector<1x1x128xf32>
    %5 = vector.shape_cast %4 : vector<1x1x128xf32> to vector<1x128xf32>
    %6 = vector.broadcast %5 : vector<1x128xf32> to vector<8x128xf32>
    %7 = arith.addf %3, %6 : vector<8x128xf32>
    %cst_7 = arith.constant 0.000000e+00 : f32
    %8 = vector.broadcast %cst_7 : f32 to vector<8x128xf32>
    %9 = arith.maximumf %7, %8 : vector<8x128xf32>
    %10 = arith.truncf %9 : vector<8x128xf32> to vector<8x128xbf16>
    %c1 = arith.constant 1 : index
    %c0_8 = arith.constant 0 : index
    %c0_9 = arith.constant 0 : index
    %11 = vector.load %arg2[%c1, %c0_8, %c0_9] : memref<7x128x128xbf16, #tpu.memory_space<vmem>>, vector<1x128x128xbf16>
    %12 = vector.shape_cast %11 : vector<1x128x128xbf16> to vector<128x128xbf16>
    %cst_10 = arith.constant dense<0.000000e+00> : vector<8x128xf32>
    %13 = tpu.matmul %10, %12, %cst_10 {dimension_numbers = #tpu.dot_dimension_numbers<[1], [0], [0], [1], [0, 0, 1, 1], [], []>} : vector<8x128xbf16>, vector<128x128xbf16>, vector<8x128xf32> -> vector<8x128xf32>
    %c1_11 = arith.constant 1 : index
    %c0_12 = arith.constant 0 : index
    %c0_13 = arith.constant 0 : index
    %14 = vector.load %arg3[%c1_11, %c0_12, %c0_13] : memref<7x1x128xf32, #tpu.memory_space<vmem>>, vector<1x1x128xf32>
    %15 = vector.shape_cast %14 : vector<1x1x128xf32> to vector<1x128xf32>
    %16 = vector.broadcast %15 : vector<1x128xf32> to vector<8x128xf32>
    %17 = arith.addf %13, %16 : vector<8x128xf32>
    %cst_14 = arith.constant 0.000000e+00 : f32
    %18 = vector.broadcast %cst_14 : f32 to vector<8x128xf32>
    %19 = arith.maximumf %17, %18 : vector<8x128xf32>
    %20 = arith.truncf %19 : vector<8x128xf32> to vector<8x128xbf16>
    %c2 = arith.constant 2 : index
    %c0_15 = arith.constant 0 : index
    %c0_16 = arith.constant 0 : index
    %21 = vector.load %arg2[%c2, %c0_15, %c0_16] : memref<7x128x128xbf16, #tpu.memory_space<vmem>>, vector<1x128x128xbf16>
    %22 = vector.shape_cast %21 : vector<1x128x128xbf16> to vector<128x128xbf16>
    %cst_17 = arith.constant dense<0.000000e+00> : vector<8x128xf32>
    %23 = tpu.matmul %20, %22, %cst_17 {dimension_numbers = #tpu.dot_dimension_numbers<[1], [0], [0], [1], [0, 0, 1, 1], [], []>} : vector<8x128xbf16>, vector<128x128xbf16>, vector<8x128xf32> -> vector<8x128xf32>
    %c2_18 = arith.constant 2 : index
    %c0_19 = arith.constant 0 : index
    %c0_20 = arith.constant 0 : index
    %24 = vector.load %arg3[%c2_18, %c0_19, %c0_20] : memref<7x1x128xf32, #tpu.memory_space<vmem>>, vector<1x1x128xf32>
    %25 = vector.shape_cast %24 : vector<1x1x128xf32> to vector<1x128xf32>
    %26 = vector.broadcast %25 : vector<1x128xf32> to vector<8x128xf32>
    %27 = arith.addf %23, %26 : vector<8x128xf32>
    %cst_21 = arith.constant 0.000000e+00 : f32
    %28 = vector.broadcast %cst_21 : f32 to vector<8x128xf32>
    %29 = arith.maximumf %27, %28 : vector<8x128xf32>
    %30 = arith.truncf %29 : vector<8x128xf32> to vector<8x128xbf16>
    %c3 = arith.constant 3 : index
    %c0_22 = arith.constant 0 : index
    %c0_23 = arith.constant 0 : index
    %31 = vector.load %arg2[%c3, %c0_22, %c0_23] : memref<7x128x128xbf16, #tpu.memory_space<vmem>>, vector<1x128x128xbf16>
    %32 = vector.shape_cast %31 : vector<1x128x128xbf16> to vector<128x128xbf16>
    %cst_24 = arith.constant dense<0.000000e+00> : vector<8x128xf32>
    %33 = tpu.matmul %30, %32, %cst_24 {dimension_numbers = #tpu.dot_dimension_numbers<[1], [0], [0], [1], [0, 0, 1, 1], [], []>} : vector<8x128xbf16>, vector<128x128xbf16>, vector<8x128xf32> -> vector<8x128xf32>
    %c3_25 = arith.constant 3 : index
    %c0_26 = arith.constant 0 : index
    %c0_27 = arith.constant 0 : index
    %34 = vector.load %arg3[%c3_25, %c0_26, %c0_27] : memref<7x1x128xf32, #tpu.memory_space<vmem>>, vector<1x1x128xf32>
    %35 = vector.shape_cast %34 : vector<1x1x128xf32> to vector<1x128xf32>
    %36 = vector.broadcast %35 : vector<1x128xf32> to vector<8x128xf32>
    %37 = arith.addf %33, %36 : vector<8x128xf32>
    %cst_28 = arith.constant 0.000000e+00 : f32
    %38 = vector.broadcast %cst_28 : f32 to vector<8x128xf32>
    %39 = arith.maximumf %37, %38 : vector<8x128xf32>
    %40 = arith.truncf %39 : vector<8x128xf32> to vector<8x128xbf16>
    %c4 = arith.constant 4 : index
    %c0_29 = arith.constant 0 : index
    %c0_30 = arith.constant 0 : index
    %41 = vector.load %arg2[%c4, %c0_29, %c0_30] : memref<7x128x128xbf16, #tpu.memory_space<vmem>>, vector<1x128x128xbf16>
    %42 = vector.shape_cast %41 : vector<1x128x128xbf16> to vector<128x128xbf16>
    %cst_31 = arith.constant dense<0.000000e+00> : vector<8x128xf32>
    %43 = tpu.matmul %40, %42, %cst_31 {dimension_numbers = #tpu.dot_dimension_numbers<[1], [0], [0], [1], [0, 0, 1, 1], [], []>} : vector<8x128xbf16>, vector<128x128xbf16>, vector<8x128xf32> -> vector<8x128xf32>
    %c4_32 = arith.constant 4 : index
    %c0_33 = arith.constant 0 : index
    %c0_34 = arith.constant 0 : index
    %44 = vector.load %arg3[%c4_32, %c0_33, %c0_34] : memref<7x1x128xf32, #tpu.memory_space<vmem>>, vector<1x1x128xf32>
    %45 = vector.shape_cast %44 : vector<1x1x128xf32> to vector<1x128xf32>
    %46 = vector.broadcast %45 : vector<1x128xf32> to vector<8x128xf32>
    %47 = arith.addf %43, %46 : vector<8x128xf32>
    %cst_35 = arith.constant 0.000000e+00 : f32
    %48 = vector.broadcast %cst_35 : f32 to vector<8x128xf32>
    %49 = arith.maximumf %47, %48 : vector<8x128xf32>
    %50 = arith.truncf %49 : vector<8x128xf32> to vector<8x128xbf16>
    %c5 = arith.constant 5 : index
    %c0_36 = arith.constant 0 : index
    %c0_37 = arith.constant 0 : index
    %51 = vector.load %arg2[%c5, %c0_36, %c0_37] : memref<7x128x128xbf16, #tpu.memory_space<vmem>>, vector<1x128x128xbf16>
    %52 = vector.shape_cast %51 : vector<1x128x128xbf16> to vector<128x128xbf16>
    %cst_38 = arith.constant dense<0.000000e+00> : vector<8x128xf32>
    %53 = tpu.matmul %50, %52, %cst_38 {dimension_numbers = #tpu.dot_dimension_numbers<[1], [0], [0], [1], [0, 0, 1, 1], [], []>} : vector<8x128xbf16>, vector<128x128xbf16>, vector<8x128xf32> -> vector<8x128xf32>
    %c5_39 = arith.constant 5 : index
    %c0_40 = arith.constant 0 : index
    %c0_41 = arith.constant 0 : index
    %54 = vector.load %arg3[%c5_39, %c0_40, %c0_41] : memref<7x1x128xf32, #tpu.memory_space<vmem>>, vector<1x1x128xf32>
    %55 = vector.shape_cast %54 : vector<1x1x128xf32> to vector<1x128xf32>
    %56 = vector.broadcast %55 : vector<1x128xf32> to vector<8x128xf32>
    %57 = arith.addf %53, %56 : vector<8x128xf32>
    %cst_42 = arith.constant 0.000000e+00 : f32
    %58 = vector.broadcast %cst_42 : f32 to vector<8x128xf32>
    %59 = arith.maximumf %57, %58 : vector<8x128xf32>
    %60 = arith.truncf %59 : vector<8x128xf32> to vector<8x128xbf16>
    %c6 = arith.constant 6 : index
    %c0_43 = arith.constant 0 : index
    %c0_44 = arith.constant 0 : index
    %61 = vector.load %arg2[%c6, %c0_43, %c0_44] : memref<7x128x128xbf16, #tpu.memory_space<vmem>>, vector<1x128x128xbf16>
    %62 = vector.shape_cast %61 : vector<1x128x128xbf16> to vector<128x128xbf16>
    %cst_45 = arith.constant dense<0.000000e+00> : vector<8x128xf32>
    %63 = tpu.matmul %60, %62, %cst_45 {dimension_numbers = #tpu.dot_dimension_numbers<[1], [0], [0], [1], [0, 0, 1, 1], [], []>} : vector<8x128xbf16>, vector<128x128xbf16>, vector<8x128xf32> -> vector<8x128xf32>
    %c6_46 = arith.constant 6 : index
    %c0_47 = arith.constant 0 : index
    %c0_48 = arith.constant 0 : index
    %64 = vector.load %arg3[%c6_46, %c0_47, %c0_48] : memref<7x1x128xf32, #tpu.memory_space<vmem>>, vector<1x1x128xf32>
    %65 = vector.shape_cast %64 : vector<1x1x128xf32> to vector<1x128xf32>
    %66 = vector.broadcast %65 : vector<1x128xf32> to vector<8x128xf32>
    %67 = arith.addf %63, %66 : vector<8x128xf32>
    %68 = arith.truncf %67 : vector<8x128xf32> to vector<8x128xbf16>
    %c0_49 = arith.constant 0 : index
    %c0_50 = arith.constant 0 : index
    %69 = vector.load %arg4[%c0_49, %c0_50] : memref<8x128xbf16, #tpu.memory_space<vmem>>, vector<8x128xbf16>
    tpu.vector_store %arg4[%c0_49, %c0_50], %68 {strides = array<i32>} : memref<8x128xbf16, #tpu.memory_space<vmem>>, vector<8x128xbf16>,
    return
  }
  func.func @transform_0(%arg0: i32) -> (i32, i32) {
    %c0_i32 = arith.constant 0 : i32
    %c0_i32_0 = arith.constant 0 : i32
    return %arg0, %c0_i32 : i32, i32
  }
  func.func @transform_1(%arg0: i32) -> (i32, i32, i32) {
    %c0_i32 = arith.constant 0 : i32
    %c0_i32_0 = arith.constant 0 : i32
    %c0_i32_1 = arith.constant 0 : i32
    %c0_i32_2 = arith.constant 0 : i32
    return %c0_i32, %c0_i32_0, %c0_i32_1 : i32, i32, i32
  }
  func.func @transform_2(%arg0: i32) -> (i32, i32, i32) {
    %c0_i32 = arith.constant 0 : i32
    %c0_i32_0 = arith.constant 0 : i32
    %c0_i32_1 = arith.constant 0 : i32
    %c0_i32_2 = arith.constant 0 : i32
    return %c0_i32, %c0_i32_0, %c0_i32_1 : i32, i32, i32
  }
  func.func @transform_3(%arg0: i32) -> (i32, i32) {
    %c0_i32 = arith.constant 0 : i32
    %c0_i32_0 = arith.constant 0 : i32
    return %arg0, %c0_i32 : i32, i32
  }
}

</mosaic_0001>

<llo_original>
// kernel: neural_network_classification.2
$region0: #{neural_network_classification.2}
  #allocation0 [shape = 'u32[]', space=smem, size = 0x4, offset = 0x4, fixed_abs, tag = 'smem constant byte address 0x4 - core index']
  #allocation1 [shape = 'u32[144,128]{1,0:T(1,128)}', space=vmem, size = 0x12000, scoped, tag = 'internal scratch']
  #allocation2 [shape = 'u32[2048]{0}', space=vmem, size = 0x2000, scoped, tag = 'scoped memory for neural_network_classification.2']
  #allocation3 [shape = 'u32[2048]{0}', space=vmem, size = 0x2000, scoped, tag = 'scoped memory for neural_network_classification.2']
  #allocation4 [shape = 'u32[2048]{0}', space=vmem, size = 0x2000, scoped, tag = 'scoped memory for neural_network_classification.2']
  #allocation5 [shape = 'u32[2048]{0}', space=vmem, size = 0x2000, scoped, tag = 'scoped memory for neural_network_classification.2']
  #allocation6 [shape = 'u32[2048]{0}', space=vmem, size = 0x2000, scoped, tag = 'scoped memory for neural_network_classification.2']
  %s0 = inlined_call_operand.hbm [shape: bf16[7,128,128], index: 0, kind: input, shape index: {}]
  %s1 = inlined_call_operand.vmem [shape: f32[7,1,128], index: 1, kind: input, shape index: {}]
  %s2 = inlined_call_operand.vmem [shape: bf16[2,18], index: 2, kind: input, shape index: {}]
  %s3 = inlined_call_operand.<no memory space> [shape: bf16[], index: 3, kind: input, shape index: {}]
  %s4 = inlined_call_operand.vmem [shape: bf16[8,128], index: 4, kind: output, shape index: {}]
  %s5 = sld [smem:[#allocation0]]
  $region26: #{neural_network_classification.2} parent=0
    _
  %s7 = ssub.s32 1, %s5
  %s8 = scalar_select 0, %s7, %s5
  %v9 = vstv %s3
  %v10 = vunpack.i.l.bf16 %v9
  %v12 = vunpack.i.h.bf16 %v9
  $region1: #{neural_network_classification.2} parent=0
    #allocation7 [shape = 'u8[229376]{0}', space=vmem, size = 0x38000, scoped, tag = 'input window, operand 1, single buffered']
    #allocation8 [shape = 's32[1]{0}', space=sflag, size = 0x4, scoped, tag = 'scoped memory for neural_network_classification.2']
    #allocation9 [shape = 'u8[2048]{0}', space=vmem, size = 0x800, dematerialized = true, scoped, tag = 'FusionAdapter Buffer %fusion.1 = bf16[8,128]{1,0:T(8,128)(2,1)} fusion(%param_2.1, %param_3), kind=kLoop, calls=%fused_computation.1.clone, metadata={op_name="jit(neural_network_classification)/jit(_pad)/pad" stack_frame_id=9}']
    %14 = vsyncpa [#allocation8], 0
    // Predicated region
    $region2: #{neural_network_classification.2} parent=1 // pred_check
      _
    $region3: #{neural_network_classification.2} parent=1 // pred_check_branch
      %16 = sbr.rel (0) target = $region5
    $region4: #{neural_network_classification.2} parent=1 // pred_region
      _
    $region5: #{neural_network_classification.2} parent=1 // pred_fallthru
      _
    // Predicated region
    $region6: #{neural_network_classification.2} parent=1 // pred_check
      _
    $region7: #{neural_network_classification.2} parent=1 // pred_check_branch
      %18 = sbr.rel (0) target = $region9
    $region8: #{neural_network_classification.2} parent=1 // pred_region
      %s20 = ssub.s32 7168, 7168
      %21 = vsyncadd [#allocation8], %s20
      %s22 = sshll.u32 [#allocation7], 4
      %s23 = int_to_ptr.vmem [resolvable:$true] %s22
      %28 = dma.hbm_to_vmem [thread:$0]  %s0, 7168, %s23, [#allocation8], 64, 64, 4
    $region9: #{neural_network_classification.2} parent=1 // pred_fallthru
      _
    // Predicated region
    $region10: #{neural_network_classification.2} parent=1 // pred_check
      _
    $region11: #{neural_network_classification.2} parent=1 // pred_check_branch
      %30 = sbr.rel (0) target = $region13
    $region12: #{neural_network_classification.2} parent=1 // pred_region
      _
    $region13: #{neural_network_classification.2} parent=1 // pred_fallthru
      _
    // Predicated region
    $region14: #{neural_network_classification.2} parent=1 // pred_check
      _
    $region15: #{neural_network_classification.2} parent=1 // pred_check_branch
      %32 = sbr.rel (0) target = $region17
    $region16: #{neural_network_classification.2} parent=1 // pred_region
      %33 = dma.done [#allocation8], 7168
    $region17: #{neural_network_classification.2} parent=1 // pred_fallthru
      _
    %s35 = sor.u32 3, 1
    %s36 = sand.u32 %s35, 1
    %v37 = vld [vmem:[%s2] sm:%s36]
    %v38 = vunpack.c.l.bf16 %v37
    %v39 = vunpack.c.h.bf16 %v37
    %v40 = vlaneseq
    %v41 = vshrl.u32 %v40, 7
    %vm43 = vcmp.lt.s32.totalorder %v41, 2
    %v44 = vsel %vm43, %v38, %v10
    %v45 = vlaneseq
    %v46 = vand.u32 %v45, 127
    %vm48 = vcmp.lt.s32.totalorder %v46, 18
    %v49 = vsel %vm48, %v44, %v10
    %v50 = vpack.c.bf16 0.0, %v49
    %s52 = ssub.s32 16, 1
    %53 = vst [vmem:[#allocation9] sm:%s52] %v50
    %v55 = vld [vmem:[#allocation9] sm:$0xf]
    %v56 = vld [vmem:[#allocation7] sm:$0xf]
    %v57 = vld [vmem:[#allocation7 + $0x4] sm:$0xf]
    %v58 = vld [vmem:[#allocation7 + $0x8] sm:$0xf]
    %v59 = vld [vmem:[#allocation7 + $0xc] sm:$0xf]
    %v60 = vld [vmem:[#allocation7 + $0x10] sm:$0xf]
    %v61 = vld [vmem:[#allocation7 + $0x14] sm:$0xf]
    %v62 = vld [vmem:[#allocation7 + $0x18] sm:$0xf]
    %v63 = vld [vmem:[#allocation7 + $0x1c] sm:$0xf]
    %v64 = vld [vmem:[#allocation7 + $0x20] sm:$0xf]
    %v65 = vld [vmem:[#allocation7 + $0x24] sm:$0xf]
    %v66 = vld [vmem:[#allocation7 + $0x28] sm:$0xf]
    %v67 = vld [vmem:[#allocation7 + $0x2c] sm:$0xf]
    %v68 = vld [vmem:[#allocation7 + $0x30] sm:$0xf]
    %v69 = vld [vmem:[#allocation7 + $0x34] sm:$0xf]
    %v70 = vld [vmem:[#allocation7 + $0x38] sm:$0xf]
    %v71 = vld [vmem:[#allocation7 + $0x3c] sm:$0xf]
    %v72 = vld [vmem:[%s1] sm:$0x1]
    %v74 = vlaneseq
    %v75 = vshrl.u32 %v74, 7
    %v76 = vsub.s32 0, %v75
    %v77 = vrot.slane %v72, %v76
    %v95 = vunpack.c.l.b16 %v56
    %v96 = vunpack.c.l.b16 %v57
    %v97 = vunpack.c.l.b16 %v58
    %v98 = vunpack.c.l.b16 %v59
    %v99 = vunpack.c.l.b16 %v60
    %v100 = vunpack.c.l.b16 %v61
    %v101 = vunpack.c.l.b16 %v62
    %v102 = vunpack.c.l.b16 %v63
    %v103 = vunpack.c.l.b16 %v64
    %v104 = vunpack.c.l.b16 %v65
    %v105 = vunpack.c.l.b16 %v66
    %v106 = vunpack.c.l.b16 %v67
    %v107 = vunpack.c.l.b16 %v68
    %v108 = vunpack.c.l.b16 %v69
    %v109 = vunpack.c.l.b16 %v70
    %v110 = vunpack.c.l.b16 %v71
    %v111 = vpack.c.b16 %v96, %v95
    %v112 = vpack.c.b16 %v98, %v97
    %v113 = vpack.c.b16 %v100, %v99
    %v114 = vpack.c.b16 %v102, %v101
    %v115 = vpack.c.b16 %v104, %v103
    %v116 = vpack.c.b16 %v106, %v105
    %v117 = vpack.c.b16 %v108, %v107
    %v118 = vpack.c.b16 %v110, %v109
    %127 = vmatprep.subr.bf16.mxu0 0
    %128 = vmatpush1.bf16.msra.mxu0 %v118
    %129 = vmatprep.subr.bf16.mxu0 0
    %130 = vmatpush1.bf16.msra.mxu0 %v117
    %131 = vmatprep.subr.bf16.mxu0 0
    %132 = vmatpush1.bf16.msra.mxu0 %v116
    %133 = vmatprep.subr.bf16.mxu0 0
    %134 = vmatpush1.bf16.msra.mxu0 %v115
    %135 = vmatprep.subr.bf16.mxu0 0
    %136 = vmatpush1.bf16.msra.mxu0 %v114
    %137 = vmatprep.subr.bf16.mxu0 0
    %138 = vmatpush1.bf16.msra.mxu0 %v113
    %139 = vmatprep.subr.bf16.mxu0 0
    %140 = vmatpush1.bf16.msra.mxu0 %v112
    %141 = vmatprep.subr.bf16.mxu0 0
    %142 = vmatpush1.bf16.msra.mxu0 %v111
    %143 = vmatprep.subr.bf16.mxu0 0
    %144 = vmatpush2.bf16.msra.mxu0 0
    %145 = vmatprep.subr.bf16.mxu0 0
    %146 = vmatpush2.bf16.msra.mxu0 0
    %147 = vmatprep.subr.bf16.mxu0 0
    %148 = vmatpush2.bf16.msra.mxu0 0
    %149 = vmatprep.subr.bf16.mxu0 0
    %150 = vmatpush2.bf16.msra.mxu0 0
    %151 = vmatprep.subr.bf16.mxu0 0
    %152 = vmatpush2.bf16.msra.mxu0 0
    %153 = vmatprep.subr.bf16.mxu0 0
    %154 = vmatpush2.bf16.msra.mxu0 0
    %155 = vmatprep.subr.bf16.mxu0 0
    %156 = vmatpush2.bf16.msra.mxu0 0
    %157 = vmatprep.subr.bf16.mxu0 0
    %158 = vmatpush2.bf16.msra.mxu0 0
    %159 = vmatprep.mubr.bf16.mxu0 0
    %160 = vmatmul.mubr.bf16.gmra.mxu0 %v55
    %v161 = vpop.f32.mrf.mxu0
    %v162 = vadd.f32 %v77, %v161
    %v163 = vpop.f32.mrf.mxu0
    %v164 = vpop.f32.mrf.mxu0
    %v165 = vpop.f32.mrf.mxu0
    %166 = vdwg.mxu0
    %v167 = vmax.f32 %v162, 0.0
    %v168 = vpack.c.bf16 %v167, %v167
    %s169 = scalar_lea.vmem [#allocation7], 64
    %v170 = vld [vmem:[%s169] sm:$0xf]
    %v171 = vld [vmem:[%s169 + $0x4] sm:$0xf]
    %v172 = vld [vmem:[%s169 + $0x8] sm:$0xf]
    %v173 = vld [vmem:[%s169 + $0xc] sm:$0xf]
    %v174 = vld [vmem:[%s169 + $0x10] sm:$0xf]
    %v175 = vld [vmem:[%s169 + $0x14] sm:$0xf]
    %v176 = vld [vmem:[%s169 + $0x18] sm:$0xf]
    %v177 = vld [vmem:[%s169 + $0x1c] sm:$0xf]
    %v178 = vld [vmem:[%s169 + $0x20] sm:$0xf]
    %v179 = vld [vmem:[%s169 + $0x24] sm:$0xf]
    %v180 = vld [vmem:[%s169 + $0x28] sm:$0xf]
    %v181 = vld [vmem:[%s169 + $0x2c] sm:$0xf]
    %v182 = vld [vmem:[%s169 + $0x30] sm:$0xf]
    %v183 = vld [vmem:[%s169 + $0x34] sm:$0xf]
    %v184 = vld [vmem:[%s169 + $0x38] sm:$0xf]
    %v185 = vld [vmem:[%s169 + $0x3c] sm:$0xf]
    %s186 = scalar_lea.vmem %s1, 1
    %v187 = vld [vmem:[%s186] sm:$0x1]
    %v189 = vlaneseq
    %v190 = vshrl.u32 %v189, 7
    %v191 = vsub.s32 0, %v190
    %v192 = vrot.slane %v187, %v191
    %v210 = vunpack.c.l.b16 %v170
    %v211 = vunpack.c.l.b16 %v171
    %v212 = vunpack.c.l.b16 %v172
    %v213 = vunpack.c.l.b16 %v173
    %v214 = vunpack.c.l.b16 %v174
    %v215 = vunpack.c.l.b16 %v175
    %v216 = vunpack.c.l.b16 %v176
    %v217 = vunpack.c.l.b16 %v177
    %v218 = vunpack.c.l.b16 %v178
    %v219 = vunpack.c.l.b16 %v179
    %v220 = vunpack.c.l.b16 %v180
    %v221 = vunpack.c.l.b16 %v181
    %v222 = vunpack.c.l.b16 %v182
    %v223 = vunpack.c.l.b16 %v183
    %v224 = vunpack.c.l.b16 %v184
    %v225 = vunpack.c.l.b16 %v185
    %v226 = vpack.c.b16 %v211, %v210
    %v227 = vpack.c.b16 %v213, %v212
    %v228 = vpack.c.b16 %v215, %v214
    %v229 = vpack.c.b16 %v217, %v216
    %v230 = vpack.c.b16 %v219, %v218
    %v231 = vpack.c.b16 %v221, %v220
    %v232 = vpack.c.b16 %v223, %v222
    %v233 = vpack.c.b16 %v225, %v224
    %242 = vmatprep.subr.bf16.mxu0 0
    %243 = vmatpush1.bf16.msra.mxu0 %v233
    %244 = vmatprep.subr.bf16.mxu0 0
    %245 = vmatpush1.bf16.msra.mxu0 %v232
    %246 = vmatprep.subr.bf16.mxu0 0
    %247 = vmatpush1.bf16.msra.mxu0 %v231
    %248 = vmatprep.subr.bf16.mxu0 0
    %249 = vmatpush1.bf16.msra.mxu0 %v230
    %250 = vmatprep.subr.bf16.mxu0 0
    %251 = vmatpush1.bf16.msra.mxu0 %v229
    %252 = vmatprep.subr.bf16.mxu0 0
    %253 = vmatpush1.bf16.msra.mxu0 %v228
    %254 = vmatprep.subr.bf16.mxu0 0
    %255 = vmatpush1.bf16.msra.mxu0 %v227
    %256 = vmatprep.subr.bf16.mxu0 0
    %257 = vmatpush1.bf16.msra.mxu0 %v226
    %258 = vmatprep.subr.bf16.mxu0 0
    %259 = vmatpush2.bf16.msra.mxu0 0
    %260 = vmatprep.subr.bf16.mxu0 0
    %261 = vmatpush2.bf16.msra.mxu0 0
    %262 = vmatprep.subr.bf16.mxu0 0
    %263 = vmatpush2.bf16.msra.mxu0 0
    %264 = vmatprep.subr.bf16.mxu0 0
    %265 = vmatpush2.bf16.msra.mxu0 0
    %266 = vmatprep.subr.bf16.mxu0 0
    %267 = vmatpush2.bf16.msra.mxu0 0
    %268 = vmatprep.subr.bf16.mxu0 0
    %269 = vmatpush2.bf16.msra.mxu0 0
    %270 = vmatprep.subr.bf16.mxu0 0
    %271 = vmatpush2.bf16.msra.mxu0 0
    %272 = vmatprep.subr.bf16.mxu0 0
    %273 = vmatpush2.bf16.msra.mxu0 0
    %274 = vmatprep.mubr.bf16.mxu0 0
    %275 = vmatmul.mubr.bf16.gmra.mxu0 %v168
    %v276 = vpop.f32.mrf.mxu0
    %v277 = vadd.f32 %v192, %v276
    %v278 = vpop.f32.mrf.mxu0
    %v279 = vpop.f32.mrf.mxu0
    %v280 = vpop.f32.mrf.mxu0
    %281 = vdwg.mxu0
    %v282 = vmax.f32 %v277, 0.0
    %v283 = vpack.c.bf16 %v282, %v282
    %s284 = scalar_lea.vmem [#allocation7], 128
    %v285 = vld [vmem:[%s284] sm:$0xf]
    %v286 = vld [vmem:[%s284 + $0x4] sm:$0xf]
    %v287 = vld [vmem:[%s284 + $0x8] sm:$0xf]
    %v288 = vld [vmem:[%s284 + $0xc] sm:$0xf]
    %v289 = vld [vmem:[%s284 + $0x10] sm:$0xf]
    %v290 = vld [vmem:[%s284 + $0x14] sm:$0xf]
    %v291 = vld [vmem:[%s284 + $0x18] sm:$0xf]
    %v292 = vld [vmem:[%s284 + $0x1c] sm:$0xf]
    %v293 = vld [vmem:[%s284 + $0x20] sm:$0xf]
    %v294 = vld [vmem:[%s284 + $0x24] sm:$0xf]
    %v295 = vld [vmem:[%s284 + $0x28] sm:$0xf]
    %v296 = vld [vmem:[%s284 + $0x2c] sm:$0xf]
    %v297 = vld [vmem:[%s284 + $0x30] sm:$0xf]
    %v298 = vld [vmem:[%s284 + $0x34] sm:$0xf]
    %v299 = vld [vmem:[%s284 + $0x38] sm:$0xf]
    %v300 = vld [vmem:[%s284 + $0x3c] sm:$0xf]
    %s301 = scalar_lea.vmem %s1, 2
    %v302 = vld [vmem:[%s301] sm:$0x1]
    %v304 = vlaneseq
    %v305 = vshrl.u32 %v304, 7
    %v306 = vsub.s32 0, %v305
    %v307 = vrot.slane %v302, %v306
    %v325 = vunpack.c.l.b16 %v285
    %v326 = vunpack.c.l.b16 %v286
    %v327 = vunpack.c.l.b16 %v287
    %v328 = vunpack.c.l.b16 %v288
    %v329 = vunpack.c.l.b16 %v289
    %v330 = vunpack.c.l.b16 %v290
    %v331 = vunpack.c.l.b16 %v291
    %v332 = vunpack.c.l.b16 %v292
    %v333 = vunpack.c.l.b16 %v293
    %v334 = vunpack.c.l.b16 %v294
    %v335 = vunpack.c.l.b16 %v295
    %v336 = vunpack.c.l.b16 %v296
    %v337 = vunpack.c.l.b16 %v297
    %v338 = vunpack.c.l.b16 %v298
    %v339 = vunpack.c.l.b16 %v299
    %v340 = vunpack.c.l.b16 %v300
    %v341 = vpack.c.b16 %v326, %v325
    %v342 = vpack.c.b16 %v328, %v327
    %v343 = vpack.c.b16 %v330, %v329
    %v344 = vpack.c.b16 %v332, %v331
    %v345 = vpack.c.b16 %v334, %v333
    %v346 = vpack.c.b16 %v336, %v335
    %v347 = vpack.c.b16 %v338, %v337
    %v348 = vpack.c.b16 %v340, %v339
    %357 = vmatprep.subr.bf16.mxu0 0
    %358 = vmatpush1.bf16.msra.mxu0 %v348
    %359 = vmatprep.subr.bf16.mxu0 0
    %360 = vmatpush1.bf16.msra.mxu0 %v347
    %361 = vmatprep.subr.bf16.mxu0 0
    %362 = vmatpush1.bf16.msra.mxu0 %v346
    %363 = vmatprep.subr.bf16.mxu0 0
    %364 = vmatpush1.bf16.msra.mxu0 %v345
    %365 = vmatprep.subr.bf16.mxu0 0
    %366 = vmatpush1.bf16.msra.mxu0 %v344
    %367 = vmatprep.subr.bf16.mxu0 0
    %368 = vmatpush1.bf16.msra.mxu0 %v343
    %369 = vmatprep.subr.bf16.mxu0 0
    %370 = vmatpush1.bf16.msra.mxu0 %v342
    %371 = vmatprep.subr.bf16.mxu0 0
    %372 = vmatpush1.bf16.msra.mxu0 %v341
    %373 = vmatprep.subr.bf16.mxu0 0
    %374 = vmatpush2.bf16.msra.mxu0 0
    %375 = vmatprep.subr.bf16.mxu0 0
    %376 = vmatpush2.bf16.msra.mxu0 0
    %377 = vmatprep.subr.bf16.mxu0 0
    %378 = vmatpush2.bf16.msra.mxu0 0
    %379 = vmatprep.subr.bf16.mxu0 0
    %380 = vmatpush2.bf16.msra.mxu0 0
    %381 = vmatprep.subr.bf16.mxu0 0
    %382 = vmatpush2.bf16.msra.mxu0 0
    %383 = vmatprep.subr.bf16.mxu0 0
    %384 = vmatpush2.bf16.msra.mxu0 0
    %385 = vmatprep.subr.bf16.mxu0 0
    %386 = vmatpush2.bf16.msra.mxu0 0
    %387 = vmatprep.subr.bf16.mxu0 0
    %388 = vmatpush2.bf16.msra.mxu0 0
    %389 = vmatprep.mubr.bf16.mxu0 0
    %390 = vmatmul.mubr.bf16.gmra.mxu0 %v283
    %v391 = vpop.f32.mrf.mxu0
    %v392 = vadd.f32 %v307, %v391
    %v393 = vpop.f32.mrf.mxu0
    %v394 = vpop.f32.mrf.mxu0
    %v395 = vpop.f32.mrf.mxu0
    %396 = vdwg.mxu0
    %v397 = vmax.f32 %v392, 0.0
    %v398 = vpack.c.bf16 %v397, %v397
    %s399 = scalar_lea.vmem [#allocation7], 192
    %v400 = vld [vmem:[%s399] sm:$0xf]
    %v401 = vld [vmem:[%s399 + $0x4] sm:$0xf]
    %v402 = vld [vmem:[%s399 + $0x8] sm:$0xf]
    %v403 = vld [vmem:[%s399 + $0xc] sm:$0xf]
    %v404 = vld [vmem:[%s399 + $0x10] sm:$0xf]
    %v405 = vld [vmem:[%s399 + $0x14] sm:$0xf]
    %v406 = vld [vmem:[%s399 + $0x18] sm:$0xf]
    %v407 = vld [vmem:[%s399 + $0x1c] sm:$0xf]
    %v408 = vld [vmem:[%s399 + $0x20] sm:$0xf]
    %v409 = vld [vmem:[%s399 + $0x24] sm:$0xf]
    %v410 = vld [vmem:[%s399 + $0x28] sm:$0xf]
    %v411 = vld [vmem:[%s399 + $0x2c] sm:$0xf]
    %v412 = vld [vmem:[%s399 + $0x30] sm:$0xf]
    %v413 = vld [vmem:[%s399 + $0x34] sm:$0xf]
    %v414 = vld [vmem:[%s399 + $0x38] sm:$0xf]
    %v415 = vld [vmem:[%s399 + $0x3c] sm:$0xf]
    %s416 = scalar_lea.vmem %s1, 3
    %v417 = vld [vmem:[%s416] sm:$0x1]
    %v419 = vlaneseq
    %v420 = vshrl.u32 %v419, 7
    %v421 = vsub.s32 0, %v420
    %v422 = vrot.slane %v417, %v421
    %v440 = vunpack.c.l.b16 %v400
    %v441 = vunpack.c.l.b16 %v401
    %v442 = vunpack.c.l.b16 %v402
    %v443 = vunpack.c.l.b16 %v403
    %v444 = vunpack.c.l.b16 %v404
    %v445 = vunpack.c.l.b16 %v405
    %v446 = vunpack.c.l.b16 %v406
    %v447 = vunpack.c.l.b16 %v407
    %v448 = vunpack.c.l.b16 %v408
    %v449 = vunpack.c.l.b16 %v409
    %v450 = vunpack.c.l.b16 %v410
    %v451 = vunpack.c.l.b16 %v411
    %v452 = vunpack.c.l.b16 %v412
    %v453 = vunpack.c.l.b16 %v413
    %v454 = vunpack.c.l.b16 %v414
    %v455 = vunpack.c.l.b16 %v415
    %v456 = vpack.c.b16 %v441, %v440
    %v457 = vpack.c.b16 %v443, %v442
    %v458 = vpack.c.b16 %v445, %v444
    %v459 = vpack.c.b16 %v447, %v446
    %v460 = vpack.c.b16 %v449, %v448
    %v461 = vpack.c.b16 %v451, %v450
    %v462 = vpack.c.b16 %v453, %v452
    %v463 = vpack.c.b16 %v455, %v454
    %472 = vmatprep.subr.bf16.mxu0 0
    %473 = vmatpush1.bf16.msra.mxu0 %v463
    %474 = vmatprep.subr.bf16.mxu0 0
    %475 = vmatpush1.bf16.msra.mxu0 %v462
    %476 = vmatprep.subr.bf16.mxu0 0
    %477 = vmatpush1.bf16.msra.mxu0 %v461
    %478 = vmatprep.subr.bf16.mxu0 0
    %479 = vmatpush1.bf16.msra.mxu0 %v460
    %480 = vmatprep.subr.bf16.mxu0 0
    %481 = vmatpush1.bf16.msra.mxu0 %v459
    %482 = vmatprep.subr.bf16.mxu0 0
    %483 = vmatpush1.bf16.msra.mxu0 %v458
    %484 = vmatprep.subr.bf16.mxu0 0
    %485 = vmatpush1.bf16.msra.mxu0 %v457
    %486 = vmatprep.subr.bf16.mxu0 0
    %487 = vmatpush1.bf16.msra.mxu0 %v456
    %488 = vmatprep.subr.bf16.mxu0 0
    %489 = vmatpush2.bf16.msra.mxu0 0
    %490 = vmatprep.subr.bf16.mxu0 0
    %491 = vmatpush2.bf16.msra.mxu0 0
    %492 = vmatprep.subr.bf16.mxu0 0
    %493 = vmatpush2.bf16.msra.mxu0 0
    %494 = vmatprep.subr.bf16.mxu0 0
    %495 = vmatpush2.bf16.msra.mxu0 0
    %496 = vmatprep.subr.bf16.mxu0 0
    %497 = vmatpush2.bf16.msra.mxu0 0
    %498 = vmatprep.subr.bf16.mxu0 0
    %499 = vmatpush2.bf16.msra.mxu0 0
    %500 = vmatprep.subr.bf16.mxu0 0
    %501 = vmatpush2.bf16.msra.mxu0 0
    %502 = vmatprep.subr.bf16.mxu0 0
    %503 = vmatpush2.bf16.msra.mxu0 0
    %504 = vmatprep.mubr.bf16.mxu0 0
    %505 = vmatmul.mubr.bf16.gmra.mxu0 %v398
    %v506 = vpop.f32.mrf.mxu0
    %v507 = vadd.f32 %v422, %v506
    %v508 = vpop.f32.mrf.mxu0
    %v509 = vpop.f32.mrf.mxu0
    %v510 = vpop.f32.mrf.mxu0
    %511 = vdwg.mxu0
    %v512 = vmax.f32 %v507, 0.0
    %v513 = vpack.c.bf16 %v512, %v512
    %s514 = scalar_lea.vmem [#allocation7], 256
    %v515 = vld [vmem:[%s514] sm:$0xf]
    %v516 = vld [vmem:[%s514 + $0x4] sm:$0xf]
    %v517 = vld [vmem:[%s514 + $0x8] sm:$0xf]
    %v518 = vld [vmem:[%s514 + $0xc] sm:$0xf]
    %v519 = vld [vmem:[%s514 + $0x10] sm:$0xf]
    %v520 = vld [vmem:[%s514 + $0x14] sm:$0xf]
    %v521 = vld [vmem:[%s514 + $0x18] sm:$0xf]
    %v522 = vld [vmem:[%s514 + $0x1c] sm:$0xf]
    %v523 = vld [vmem:[%s514 + $0x20] sm:$0xf]
    %v524 = vld [vmem:[%s514 + $0x24] sm:$0xf]
    %v525 = vld [vmem:[%s514 + $0x28] sm:$0xf]
    %v526 = vld [vmem:[%s514 + $0x2c] sm:$0xf]
    %v527 = vld [vmem:[%s514 + $0x30] sm:$0xf]
    %v528 = vld [vmem:[%s514 + $0x34] sm:$0xf]
    %v529 = vld [vmem:[%s514 + $0x38] sm:$0xf]
    %v530 = vld [vmem:[%s514 + $0x3c] sm:$0xf]
    %s531 = scalar_lea.vmem %s1, 4
    %v532 = vld [vmem:[%s531] sm:$0x1]
    %v534 = vlaneseq
    %v535 = vshrl.u32 %v534, 7
    %v536 = vsub.s32 0, %v535
    %v537 = vrot.slane %v532, %v536
    %v555 = vunpack.c.l.b16 %v515
    %v556 = vunpack.c.l.b16 %v516
    %v557 = vunpack.c.l.b16 %v517
    %v558 = vunpack.c.l.b16 %v518
    %v559 = vunpack.c.l.b16 %v519
    %v560 = vunpack.c.l.b16 %v520
    %v561 = vunpack.c.l.b16 %v521
    %v562 = vunpack.c.l.b16 %v522
    %v563 = vunpack.c.l.b16 %v523
    %v564 = vunpack.c.l.b16 %v524
    %v565 = vunpack.c.l.b16 %v525
    %v566 = vunpack.c.l.b16 %v526
    %v567 = vunpack.c.l.b16 %v527
    %v568 = vunpack.c.l.b16 %v528
    %v569 = vunpack.c.l.b16 %v529
    %v570 = vunpack.c.l.b16 %v530
    %v571 = vpack.c.b16 %v556, %v555
    %v572 = vpack.c.b16 %v558, %v557
    %v573 = vpack.c.b16 %v560, %v559
    %v574 = vpack.c.b16 %v562, %v561
    %v575 = vpack.c.b16 %v564, %v563
    %v576 = vpack.c.b16 %v566, %v565
    %v577 = vpack.c.b16 %v568, %v567
    %v578 = vpack.c.b16 %v570, %v569
    %587 = vmatprep.subr.bf16.mxu0 0
    %588 = vmatpush1.bf16.msra.mxu0 %v578
    %589 = vmatprep.subr.bf16.mxu0 0
    %590 = vmatpush1.bf16.msra.mxu0 %v577
    %591 = vmatprep.subr.bf16.mxu0 0
    %592 = vmatpush1.bf16.msra.mxu0 %v576
    %593 = vmatprep.subr.bf16.mxu0 0
    %594 = vmatpush1.bf16.msra.mxu0 %v575
    %595 = vmatprep.subr.bf16.mxu0 0
    %596 = vmatpush1.bf16.msra.mxu0 %v574
    %597 = vmatprep.subr.bf16.mxu0 0
    %598 = vmatpush1.bf16.msra.mxu0 %v573
    %599 = vmatprep.subr.bf16.mxu0 0
    %600 = vmatpush1.bf16.msra.mxu0 %v572
    %601 = vmatprep.subr.bf16.mxu0 0
    %602 = vmatpush1.bf16.msra.mxu0 %v571
    %603 = vmatprep.subr.bf16.mxu0 0
    %604 = vmatpush2.bf16.msra.mxu0 0
    %605 = vmatprep.subr.bf16.mxu0 0
    %606 = vmatpush2.bf16.msra.mxu0 0
    %607 = vmatprep.subr.bf16.mxu0 0
    %608 = vmatpush2.bf16.msra.mxu0 0
    %609 = vmatprep.subr.bf16.mxu0 0
    %610 = vmatpush2.bf16.msra.mxu0 0
    %611 = vmatprep.subr.bf16.mxu0 0
    %612 = vmatpush2.bf16.msra.mxu0 0
    %613 = vmatprep.subr.bf16.mxu0 0
    %614 = vmatpush2.bf16.msra.mxu0 0
    %615 = vmatprep.subr.bf16.mxu0 0
    %616 = vmatpush2.bf16.msra.mxu0 0
    %617 = vmatprep.subr.bf16.mxu0 0
    %618 = vmatpush2.bf16.msra.mxu0 0
    %619 = vmatprep.mubr.bf16.mxu0 0
    %620 = vmatmul.mubr.bf16.gmra.mxu0 %v513
    %v621 = vpop.f32.mrf.mxu0
    %v622 = vadd.f32 %v537, %v621
    %v623 = vpop.f32.mrf.mxu0
    %v624 = vpop.f32.mrf.mxu0
    %v625 = vpop.f32.mrf.mxu0
    %626 = vdwg.mxu0
    %v627 = vmax.f32 %v622, 0.0
    %v628 = vpack.c.bf16 %v627, %v627
    %s629 = scalar_lea.vmem [#allocation7], 320
    %v630 = vld [vmem:[%s629] sm:$0xf]
    %v631 = vld [vmem:[%s629 + $0x4] sm:$0xf]
    %v632 = vld [vmem:[%s629 + $0x8] sm:$0xf]
    %v633 = vld [vmem:[%s629 + $0xc] sm:$0xf]
    %v634 = vld [vmem:[%s629 + $0x10] sm:$0xf]
    %v635 = vld [vmem:[%s629 + $0x14] sm:$0xf]
    %v636 = vld [vmem:[%s629 + $0x18] sm:$0xf]
    %v637 = vld [vmem:[%s629 + $0x1c] sm:$0xf]
    %v638 = vld [vmem:[%s629 + $0x20] sm:$0xf]
    %v639 = vld [vmem:[%s629 + $0x24] sm:$0xf]
    %v640 = vld [vmem:[%s629 + $0x28] sm:$0xf]
    %v641 = vld [vmem:[%s629 + $0x2c] sm:$0xf]
    %v642 = vld [vmem:[%s629 + $0x30] sm:$0xf]
    %v643 = vld [vmem:[%s629 + $0x34] sm:$0xf]
    %v644 = vld [vmem:[%s629 + $0x38] sm:$0xf]
    %v645 = vld [vmem:[%s629 + $0x3c] sm:$0xf]
    %s646 = scalar_lea.vmem %s1, 5
    %v647 = vld [vmem:[%s646] sm:$0x1]
    %v649 = vlaneseq
    %v650 = vshrl.u32 %v649, 7
    %v651 = vsub.s32 0, %v650
    %v652 = vrot.slane %v647, %v651
    %v670 = vunpack.c.l.b16 %v630
    %v671 = vunpack.c.l.b16 %v631
    %v672 = vunpack.c.l.b16 %v632
    %v673 = vunpack.c.l.b16 %v633
    %v674 = vunpack.c.l.b16 %v634
    %v675 = vunpack.c.l.b16 %v635
    %v676 = vunpack.c.l.b16 %v636
    %v677 = vunpack.c.l.b16 %v637
    %v678 = vunpack.c.l.b16 %v638
    %v679 = vunpack.c.l.b16 %v639
    %v680 = vunpack.c.l.b16 %v640
    %v681 = vunpack.c.l.b16 %v641
    %v682 = vunpack.c.l.b16 %v642
    %v683 = vunpack.c.l.b16 %v643
    %v684 = vunpack.c.l.b16 %v644
    %v685 = vunpack.c.l.b16 %v645
    %v686 = vpack.c.b16 %v671, %v670
    %v687 = vpack.c.b16 %v673, %v672
    %v688 = vpack.c.b16 %v675, %v674
    %v689 = vpack.c.b16 %v677, %v676
    %v690 = vpack.c.b16 %v679, %v678
    %v691 = vpack.c.b16 %v681, %v680
    %v692 = vpack.c.b16 %v683, %v682
    %v693 = vpack.c.b16 %v685, %v684
    %702 = vmatprep.subr.bf16.mxu0 0
    %703 = vmatpush1.bf16.msra.mxu0 %v693
    %704 = vmatprep.subr.bf16.mxu0 0
    %705 = vmatpush1.bf16.msra.mxu0 %v692
    %706 = vmatprep.subr.bf16.mxu0 0
    %707 = vmatpush1.bf16.msra.mxu0 %v691
    %708 = vmatprep.subr.bf16.mxu0 0
    %709 = vmatpush1.bf16.msra.mxu0 %v690
    %710 = vmatprep.subr.bf16.mxu0 0
    %711 = vmatpush1.bf16.msra.mxu0 %v689
    %712 = vmatprep.subr.bf16.mxu0 0
    %713 = vmatpush1.bf16.msra.mxu0 %v688
    %714 = vmatprep.subr.bf16.mxu0 0
    %715 = vmatpush1.bf16.msra.mxu0 %v687
    %716 = vmatprep.subr.bf16.mxu0 0
    %717 = vmatpush1.bf16.msra.mxu0 %v686
    %718 = vmatprep.subr.bf16.mxu0 0
    %719 = vmatpush2.bf16.msra.mxu0 0
    %720 = vmatprep.subr.bf16.mxu0 0
    %721 = vmatpush2.bf16.msra.mxu0 0
    %722 = vmatprep.subr.bf16.mxu0 0
    %723 = vmatpush2.bf16.msra.mxu0 0
    %724 = vmatprep.subr.bf16.mxu0 0
    %725 = vmatpush2.bf16.msra.mxu0 0
    %726 = vmatprep.subr.bf16.mxu0 0
    %727 = vmatpush2.bf16.msra.mxu0 0
    %728 = vmatprep.subr.bf16.mxu0 0
    %729 = vmatpush2.bf16.msra.mxu0 0
    %730 = vmatprep.subr.bf16.mxu0 0
    %731 = vmatpush2.bf16.msra.mxu0 0
    %732 = vmatprep.subr.bf16.mxu0 0
    %733 = vmatpush2.bf16.msra.mxu0 0
    %734 = vmatprep.mubr.bf16.mxu0 0
    %735 = vmatmul.mubr.bf16.gmra.mxu0 %v628
    %v736 = vpop.f32.mrf.mxu0
    %v737 = vadd.f32 %v652, %v736
    %v738 = vpop.f32.mrf.mxu0
    %v739 = vpop.f32.mrf.mxu0
    %v740 = vpop.f32.mrf.mxu0
    %741 = vdwg.mxu0
    %v742 = vmax.f32 %v737, 0.0
    %v743 = vpack.c.bf16 %v742, %v742
    %s744 = scalar_lea.vmem [#allocation7], 384
    %v745 = vld [vmem:[%s744] sm:$0xf]
    %v746 = vld [vmem:[%s744 + $0x4] sm:$0xf]
    %v747 = vld [vmem:[%s744 + $0x8] sm:$0xf]
    %v748 = vld [vmem:[%s744 + $0xc] sm:$0xf]
    %v749 = vld [vmem:[%s744 + $0x10] sm:$0xf]
    %v750 = vld [vmem:[%s744 + $0x14] sm:$0xf]
    %v751 = vld [vmem:[%s744 + $0x18] sm:$0xf]
    %v752 = vld [vmem:[%s744 + $0x1c] sm:$0xf]
    %v753 = vld [vmem:[%s744 + $0x20] sm:$0xf]
    %v754 = vld [vmem:[%s744 + $0x24] sm:$0xf]
    %v755 = vld [vmem:[%s744 + $0x28] sm:$0xf]
    %v756 = vld [vmem:[%s744 + $0x2c] sm:$0xf]
    %v757 = vld [vmem:[%s744 + $0x30] sm:$0xf]
    %v758 = vld [vmem:[%s744 + $0x34] sm:$0xf]
    %v759 = vld [vmem:[%s744 + $0x38] sm:$0xf]
    %v760 = vld [vmem:[%s744 + $0x3c] sm:$0xf]
    %s761 = scalar_lea.vmem %s1, 6
    %v762 = vld [vmem:[%s761] sm:$0x1]
    %v764 = vlaneseq
    %v765 = vshrl.u32 %v764, 7
    %v766 = vsub.s32 0, %v765
    %v767 = vrot.slane %v762, %v766
    %v785 = vunpack.c.l.b16 %v745
    %v786 = vunpack.c.l.b16 %v746
    %v787 = vunpack.c.l.b16 %v747
    %v788 = vunpack.c.l.b16 %v748
    %v789 = vunpack.c.l.b16 %v749
    %v790 = vunpack.c.l.b16 %v750
    %v791 = vunpack.c.l.b16 %v751
    %v792 = vunpack.c.l.b16 %v752
    %v793 = vunpack.c.l.b16 %v753
    %v794 = vunpack.c.l.b16 %v754
    %v795 = vunpack.c.l.b16 %v755
    %v796 = vunpack.c.l.b16 %v756
    %v797 = vunpack.c.l.b16 %v757
    %v798 = vunpack.c.l.b16 %v758
    %v799 = vunpack.c.l.b16 %v759
    %v800 = vunpack.c.l.b16 %v760
    %v801 = vpack.c.b16 %v786, %v785
    %v802 = vpack.c.b16 %v788, %v787
    %v803 = vpack.c.b16 %v790, %v789
    %v804 = vpack.c.b16 %v792, %v791
    %v805 = vpack.c.b16 %v794, %v793
    %v806 = vpack.c.b16 %v796, %v795
    %v807 = vpack.c.b16 %v798, %v797
    %v808 = vpack.c.b16 %v800, %v799
    %817 = vmatprep.subr.bf16.mxu0 0
    %818 = vmatpush1.bf16.msra.mxu0 %v808
    %819 = vmatprep.subr.bf16.mxu0 0
    %820 = vmatpush1.bf16.msra.mxu0 %v807
    %821 = vmatprep.subr.bf16.mxu0 0
    %822 = vmatpush1.bf16.msra.mxu0 %v806
    %823 = vmatprep.subr.bf16.mxu0 0
    %824 = vmatpush1.bf16.msra.mxu0 %v805
    %825 = vmatprep.subr.bf16.mxu0 0
    %826 = vmatpush1.bf16.msra.mxu0 %v804
    %827 = vmatprep.subr.bf16.mxu0 0
    %828 = vmatpush1.bf16.msra.mxu0 %v803
    %829 = vmatprep.subr.bf16.mxu0 0
    %830 = vmatpush1.bf16.msra.mxu0 %v802
    %831 = vmatprep.subr.bf16.mxu0 0
    %832 = vmatpush1.bf16.msra.mxu0 %v801
    %833 = vmatprep.subr.bf16.mxu0 0
    %834 = vmatpush2.bf16.msra.mxu0 0
    %835 = vmatprep.subr.bf16.mxu0 0
    %836 = vmatpush2.bf16.msra.mxu0 0
    %837 = vmatprep.subr.bf16.mxu0 0
    %838 = vmatpush2.bf16.msra.mxu0 0
    %839 = vmatprep.subr.bf16.mxu0 0
    %840 = vmatpush2.bf16.msra.mxu0 0
    %841 = vmatprep.subr.bf16.mxu0 0
    %842 = vmatpush2.bf16.msra.mxu0 0
    %843 = vmatprep.subr.bf16.mxu0 0
    %844 = vmatpush2.bf16.msra.mxu0 0
    %845 = vmatprep.subr.bf16.mxu0 0
    %846 = vmatpush2.bf16.msra.mxu0 0
    %847 = vmatprep.subr.bf16.mxu0 0
    %848 = vmatpush2.bf16.msra.mxu0 0
    %849 = vmatprep.mubr.bf16.mxu0 0
    %850 = vmatmul.mubr.bf16.gmra.mxu0 %v743
    %v851 = vpop.f32.mrf.mxu0
    %v852 = vadd.f32 %v767, %v851
    %v853 = vpop.f32.mrf.mxu0
    %v854 = vpop.f32.mrf.mxu0
    %v855 = vpop.f32.mrf.mxu0
    %856 = vdwg.mxu0
    %v857 = vpack.c.bf16 %v852, %v852
    %858 = vst [vmem:[%s4] sm:$0xf] %v857
    // Predicated region
    $region18: #{neural_network_classification.2} parent=1 // pred_check
      _
    $region19: #{neural_network_classification.2} parent=1 // pred_check_branch
      %860 = sbr.rel (0) target = $region21
    $region20: #{neural_network_classification.2} parent=1 // pred_region
      _
    $region21: #{neural_network_classification.2} parent=1 // pred_fallthru
      _
    // Predicated region
    $region22: #{neural_network_classification.2} parent=1 // pred_check
      _
    $region23: #{neural_network_classification.2} parent=1 // pred_check_branch
      %862 = sbr.rel (0) target = $region25
    $region24: #{neural_network_classification.2} parent=1 // pred_region
      _
    $region25: #{neural_network_classification.2} parent=1 // pred_fallthru
      _
    %863 = vsyncpa [#allocation8], 1

</llo_original>
